<compile_context>
chip_gen: v7x
topology: tpu7x:2x2x1
jax: 0.10.0
libtpu: 0.0.40
codegen_flags: <defaults>
</compile_context>

<pallas_src>
import jax
import jax.numpy as jnp
from jax.experimental import pallas as pl
from jax.experimental.pallas import tpu as pltpu


def _round_up(n, m):
    return ((n + m - 1) // m) * m


def _linear_policy_kernel(x_ref, w_ref, b_ref, o_ref):
    x = x_ref[...]
    w = w_ref[...]
    if x.dtype != w.dtype:
        # In-kernel cast (VPU) keeps the MXU at bf16 throughput without an
        # extra wrapper-side HBM pass over x.
        x = x.astype(w.dtype)
    scores = jnp.dot(x, w, preferred_element_type=jnp.float32)
    o_ref[...] = (scores + b_ref[...].astype(jnp.float32)).astype(o_ref.dtype)


def prep_policy_weights(w, b, *, block_n=256, use_bf16=False):
    """One-time weight-side prep (hoisted out of the per-call path).

    Casts w to bf16 if requested and pads the action dim to a 128-multiple
    only when it is both unaligned and larger than a single N tile.
    """
    D, A = w.shape
    b = jnp.reshape(b, (1, A)).astype(jnp.float32)
    if use_bf16:
        w = w.astype(jnp.bfloat16)
    if A % 128 != 0 and A > block_n:
        A_pad = _round_up(A, 128)
        w = jnp.pad(w, ((0, 0), (0, A_pad - A)))
        b = jnp.pad(b, ((0, 0), (0, A_pad - A)))
    return w, b


def linear_policy(x, w, b, *, n_actions=None, block_b=256, block_n=256,
                  out_dtype=jnp.float32, force_kernel=False):
    """scores = x @ w + b via a Pallas TPU kernel.

    x: (B, D) activations, w: (D, A_pad) prepped weights, b: (1, A_pad).
    No per-call padding copies of x/out; batch and action axes are gridded
    with cdiv, so partial edge tiles are handled by Pallas.
    """
    B, D = x.shape
    Dw, A_pad = w.shape
    assert D == Dw, (D, Dw)
    A = n_actions if n_actions is not None else A_pad

    # Tiny-shape fast path: pallas per-grid-step overhead + MXU
    # under-utilisation make the kernel strictly slower than the fused XLA dot.
    if not force_kernel and B * D * A_pad <= (1 << 15):
        out = (jnp.dot(x, w.astype(x.dtype),
                       preferred_element_type=jnp.float32) + b).astype(out_dtype)
        return out if A == A_pad else out[:, :A]

    # Tile sizes: 256-aligned defaults (v6e/v7x 256x256 bf16 MXU).  Blocks
    # equal to the full array dim are always legal, so unaligned B / D / A use
    # full-dim blocks instead of padded copies.
    tb = B if B <= block_b else block_b              # block_b is a mult of 8
    tn = A_pad if A_pad <= block_n else block_n      # block_n is a mult of 128
    grid_b = pl.cdiv(B, tb)
    grid_n = pl.cdiv(A_pad, tn)

    x_spec = pl.BlockSpec((tb, D), lambda i, j: (i, 0))    # resident across j
    out_spec = pl.BlockSpec((tb, tn), lambda i, j: (i, j))

    def run(single_buffer_weights):
        if single_buffer_weights:
            # Constant block index across the whole grid: one buffer suffices,
            # halving the resident-weight VMEM footprint.
            w_spec = pl.BlockSpec((D, tn), lambda i, j: (0, j),
                                  pipeline_mode=pl.Buffered(1))
            b_spec = pl.BlockSpec((1, tn), lambda i, j: (0, j),
                                  pipeline_mode=pl.Buffered(1))
            w_bufs = 1
        else:
            w_spec = pl.BlockSpec((D, tn), lambda i, j: (0, j))
            b_spec = pl.BlockSpec((1, tn), lambda i, j: (0, j))
            w_bufs = 2

        x_bytes = jnp.dtype(x.dtype).itemsize
        w_bytes = jnp.dtype(w.dtype).itemsize
        o_bytes = jnp.dtype(out_dtype).itemsize
        need = (2 * tb * D * x_bytes           # double-buffered x tiles
                + w_bufs * D * tn * w_bytes    # weight tiles
                + w_bufs * tn * 4              # bias tiles
                + 2 * tb * tn * o_bytes)       # double-buffered out tiles
        vmem_limit = min(max(int(need * 1.5) + (2 << 20), 16 << 20), 64 << 20)

        return pl.pallas_call(
            _linear_policy_kernel,
            out_shape=jax.ShapeDtypeStruct((B, A_pad), out_dtype),
            grid=(grid_b, grid_n),
            in_specs=[x_spec, w_spec, b_spec],
            out_specs=out_spec,
            compiler_params=pltpu.CompilerParams(
                # Every grid point writes a distinct output tile -> both axes
                # are independent work (shards across TCs on v7x).
                dimension_semantics=("parallel", "parallel"),
                vmem_limit_bytes=vmem_limit,
            ),
        )(x, w, b)

    if grid_n == 1:
        try:
            out = run(True)
        except Exception:        # conservative fallback if Buffered(1) rejected
            out = run(False)
    else:
        out = run(False)

    return out if A == A_pad else out[:, :A]


class LinearPolicy:
    """Concrete policy: state features -> action scores (Pallas matmul+bias)."""

    def __init__(self, dim, n_actions, key, *, use_bf16=False,
                 block_b=256, block_n=256, out_dtype=jnp.float32,
                 force_kernel=False):
        self.dim = dim
        self.n_actions = n_actions
        self.block_b = block_b
        self.block_n = block_n
        self.out_dtype = out_dtype
        self.force_kernel = force_kernel
        # Deterministic in-script init (no checkpoint loading).
        self.w = (jax.random.normal(key, (dim, n_actions), jnp.float32)
                  * (1.0 / jnp.sqrt(dim)))
        self.b = jnp.zeros((1, n_actions), jnp.float32)
        # Weight prep hoisted here (runs once, not once per forward call).
        self.wp, self.bp = prep_policy_weights(
            self.w, self.b, block_n=block_n, use_bf16=use_bf16)

    def __call__(self, state):
        # Callers should batch many states per call so pallas_call /
        # per-grid-step overhead (~0.35 us/step) amortizes.
        return linear_policy(state, self.wp, self.bp,
                             n_actions=self.n_actions,
                             block_b=self.block_b, block_n=self.block_n,
                             out_dtype=self.out_dtype,
                             force_kernel=self.force_kernel)


class NoopLearner:
    """Faithful port: forward delegates to the wrapped policy, objective is 0.0."""

    def __init__(self, policy):
        self.policy = policy
        # TypeMemory-equivalent parameter (unused in forward, kept for parity).
        self._typememory_param = jnp.zeros((1,), jnp.float32)

    def __call__(self, state):
        return self.policy(state)

    def get_objective(self, loss):
        return 0.0


if __name__ == "__main__":
    key = jax.random.PRNGKey(0)
    k_state, k_policy, k_state2, k_policy2 = jax.random.split(key, 4)

    # Toy shapes implied by the module: a couple of states, small feature dim.
    batch, dim, n_actions = 2, 32, 16
    state = jax.random.normal(k_state, (batch, dim), jnp.float32)
    policy = LinearPolicy(dim, n_actions, k_policy, force_kernel=True)
    learner = NoopLearner(policy)

    out = jax.block_until_ready(learner(state))
    ref = jnp.dot(state, policy.w, precision=jax.lax.Precision.HIGHEST) + policy.b
    assert out.shape == (batch, n_actions), out.shape
    assert jnp.allclose(out, ref, atol=1e-4, rtol=1e-4)
    assert learner.get_objective(1.234) == 0.0

    # Second pass: exercises cdiv partial B tile + N-tiled (double-buffered)
    # weights without any padding copies.
    B2, D2, A2 = 20, 128, 256
    state2 = jax.random.normal(k_state2, (B2, D2), jnp.float32)
    policy2 = LinearPolicy(D2, A2, k_policy2, force_kernel=True,
                           block_b=8, block_n=128)
    out2 = jax.block_until_ready(NoopLearner(policy2)(state2))
    ref2 = jnp.dot(state2, policy2.w,
                   precision=jax.lax.Precision.HIGHEST) + policy2.b
    assert out2.shape == (B2, A2), out2.shape
    assert jnp.allclose(out2, ref2, atol=1e-3, rtol=1e-3)

    print("KERNEL_OK")
</pallas_src>

<mosaic_0001>
module attributes {stable_mosaic.version = 11 : i64} {
  func.func @_linear_policy_kernel(%arg0: i32, %arg1: i32, %arg2: memref<2x32xf32, #tpu.memory_space<vmem>>, %arg3: memref<32x16xf32, #tpu.memory_space<vmem>>, %arg4: memref<1x16xf32, #tpu.memory_space<vmem>>, %arg5: memref<2x16xf32, #tpu.memory_space<vmem>>) attributes {dimension_semantics = [#tpu.dimension_semantics<parallel>, #tpu.dimension_semantics<parallel>], iteration_bounds = array<i64: 1, 1>, scalar_prefetch = 0 : i64, scratch_operands = 0 : i64, tpu.core_type = #tpu.core_type<tc>, window_params = [{transform_indices = @transform_0, window_bounds = array<i64: 2, 32>}, {pipeline_mode = #tpu.pipeline_mode<synchronous>, transform_indices = @transform_1, window_bounds = array<i64: 32, 16>}, {pipeline_mode = #tpu.pipeline_mode<synchronous>, transform_indices = @transform_2, window_bounds = array<i64: 1, 16>}, {transform_indices = @transform_3, window_bounds = array<i64: 2, 16>}]} {
    %c0 = arith.constant 0 : index
    %c0_0 = arith.constant 0 : index
    %0 = vector.load %arg2[%c0, %c0_0] : memref<2x32xf32, #tpu.memory_space<vmem>>, vector<2x32xf32>
    %c0_1 = arith.constant 0 : index
    %c0_2 = arith.constant 0 : index
    %1 = vector.load %arg3[%c0_1, %c0_2] : memref<32x16xf32, #tpu.memory_space<vmem>>, vector<32x16xf32>
    %cst = arith.constant dense<0.000000e+00> : vector<2x16xf32>
    %2 = tpu.matmul %0, %1, %cst {dimension_numbers = #tpu.dot_dimension_numbers<[1], [0], [0], [1], [0, 0, 1, 1], [], []>} : vector<2x32xf32>, vector<32x16xf32>, vector<2x16xf32> -> vector<2x16xf32>
    %c0_3 = arith.constant 0 : index
    %c0_4 = arith.constant 0 : index
    %3 = vector.load %arg4[%c0_3, %c0_4] : memref<1x16xf32, #tpu.memory_space<vmem>>, vector<1x16xf32>
    %4 = vector.broadcast %3 : vector<1x16xf32> to vector<2x16xf32>
    %5 = arith.addf %2, %4 : vector<2x16xf32>
    %c0_5 = arith.constant 0 : index
    %c0_6 = arith.constant 0 : index
    %6 = vector.load %arg5[%c0_5, %c0_6] : memref<2x16xf32, #tpu.memory_space<vmem>>, vector<2x16xf32>
    tpu.vector_store %arg5[%c0_5, %c0_6], %5 {strides = array<i32>} : memref<2x16xf32, #tpu.memory_space<vmem>>, vector<2x16xf32>,
    return
  }
  func.func @transform_0(%arg0: i32, %arg1: i32) -> (i32, i32) {
    %c0_i32 = arith.constant 0 : i32
    %c0_i32_0 = arith.constant 0 : i32
    return %arg0, %c0_i32 : i32, i32
  }
  func.func @transform_1(%arg0: i32, %arg1: i32) -> (i32, i32) {
    %c0_i32 = arith.constant 0 : i32
    %c0_i32_0 = arith.constant 0 : i32
    return %c0_i32, %arg1 : i32, i32
  }
  func.func @transform_2(%arg0: i32, %arg1: i32) -> (i32, i32) {
    %c0_i32 = arith.constant 0 : i32
    %c0_i32_0 = arith.constant 0 : i32
    return %c0_i32, %arg1 : i32, i32
  }
  func.func @transform_3(%arg0: i32, %arg1: i32) -> (i32, i32) {
    %c0_i32 = arith.constant 0 : i32
    return %arg0, %arg1 : i32, i32
  }
}

module attributes {stable_mosaic.version = 11 : i64} {
  func.func @_linear_policy_kernel(%arg0: i32, %arg1: i32, %arg2: memref<2x32xf32, #tpu.memory_space<vmem>>, %arg3: memref<32x16xf32, #tpu.memory_space<vmem>>, %arg4: memref<1x16xf32, #tpu.memory_space<vmem>>, %arg5: memref<2x16xf32, #tpu.memory_space<vmem>>) attributes {dimension_semantics = [#tpu.dimension_semantics<parallel>, #tpu.dimension_semantics<parallel>], iteration_bounds = array<i64: 1, 1>, scalar_prefetch = 0 : i64, scratch_operands = 0 : i64, tpu.core_type = #tpu.core_type<tc>, window_params = [{transform_indices = @transform_0, window_bounds = array<i64: 2, 32>}, {transform_indices = @transform_1, window_bounds = array<i64: 32, 16>}, {transform_indices = @transform_2, window_bounds = array<i64: 1, 16>}, {transform_indices = @transform_3, window_bounds = array<i64: 2, 16>}]} {
    %c0 = arith.constant 0 : index
    %c0_0 = arith.constant 0 : index
    %0 = vector.load %arg2[%c0, %c0_0] : memref<2x32xf32, #tpu.memory_space<vmem>>, vector<2x32xf32>
    %c0_1 = arith.constant 0 : index
    %c0_2 = arith.constant 0 : index
    %1 = vector.load %arg3[%c0_1, %c0_2] : memref<32x16xf32, #tpu.memory_space<vmem>>, vector<32x16xf32>
    %cst = arith.constant dense<0.000000e+00> : vector<2x16xf32>
    %2 = tpu.matmul %0, %1, %cst {dimension_numbers = #tpu.dot_dimension_numbers<[1], [0], [0], [1], [0, 0, 1, 1], [], []>} : vector<2x32xf32>, vector<32x16xf32>, vector<2x16xf32> -> vector<2x16xf32>
    %c0_3 = arith.constant 0 : index
    %c0_4 = arith.constant 0 : index
    %3 = vector.load %arg4[%c0_3, %c0_4] : memref<1x16xf32, #tpu.memory_space<vmem>>, vector<1x16xf32>
    %4 = vector.broadcast %3 : vector<1x16xf32> to vector<2x16xf32>
    %5 = arith.addf %2, %4 : vector<2x16xf32>
    %c0_5 = arith.constant 0 : index
    %c0_6 = arith.constant 0 : index
    %6 = vector.load %arg5[%c0_5, %c0_6] : memref<2x16xf32, #tpu.memory_space<vmem>>, vector<2x16xf32>
    tpu.vector_store %arg5[%c0_5, %c0_6], %5 {strides = array<i32>} : memref<2x16xf32, #tpu.memory_space<vmem>>, vector<2x16xf32>,
    return
  }
  func.func @transform_0(%arg0: i32, %arg1: i32) -> (i32, i32) {
    %c0_i32 = arith.constant 0 : i32
    %c0_i32_0 = arith.constant 0 : i32
    return %arg0, %c0_i32 : i32, i32
  }
  func.func @transform_1(%arg0: i32, %arg1: i32) -> (i32, i32) {
    %c0_i32 = arith.constant 0 : i32
    %c0_i32_0 = arith.constant 0 : i32
    return %c0_i32, %arg1 : i32, i32
  }
  func.func @transform_2(%arg0: i32, %arg1: i32) -> (i32, i32) {
    %c0_i32 = arith.constant 0 : i32
    %c0_i32_0 = arith.constant 0 : i32
    return %c0_i32, %arg1 : i32, i32
  }
  func.func @transform_3(%arg0: i32, %arg1: i32) -> (i32, i32) {
    %c0_i32 = arith.constant 0 : i32
    return %arg0, %arg1 : i32, i32
  }
}

</mosaic_0001>

<llo_original>
// kernel: tpu_custom_call.1
$region0: #{tpu_custom_call.1}
  #allocation0 [shape = 'u32[]', space=smem, size = 0x4, offset = 0x4, fixed_abs, tag = 'smem constant byte address 0x4 - core index']
  #allocation1 [shape = 'u32[144,128]{1,0:T(1,128)}', space=vmem, size = 0x12000, scoped, tag = 'internal scratch']
  %s0 = inlined_call_operand.vmem [shape: f32[2,32], index: 0, kind: input, shape index: {}]
  %s1 = inlined_call_operand.vmem [shape: f32[32,16], index: 1, kind: input, shape index: {}]
  %s2 = inlined_call_operand.vmem [shape: f32[1,16], index: 2, kind: input, shape index: {}]
  %s3 = inlined_call_operand.hbm [shape: f32[2,16], index: 3, kind: output, shape index: {}]
  %s4 = sld [smem:[#allocation0]]
  $region22: #{tpu_custom_call.1} parent=0
    _
  %s6 = ssub.s32 1, %s4
  %s7 = scalar_select 0, %s6, %s4
  $region1: #{tpu_custom_call.1} parent=0
    #allocation2 [shape = 'u8[1024]{0}', space=vmem, size = 0x400, scoped, tag = 'output window, operand 0, single buffered']
    #allocation3 [shape = 's32[1]{0}', space=sflag, size = 0x4, scoped, tag = 'scoped memory for tpu_custom_call.1']
    %8 = vsyncpa [#allocation3], 0
    // Predicated region
    $region2: #{tpu_custom_call.1} parent=1 // pred_check
      _
    $region3: #{tpu_custom_call.1} parent=1 // pred_check_branch
      %10 = sbr.rel (0) target = $region5
    $region4: #{tpu_custom_call.1} parent=1 // pred_region
      _
    $region5: #{tpu_custom_call.1} parent=1 // pred_fallthru
      _
    // Predicated region
    $region6: #{tpu_custom_call.1} parent=1 // pred_check
      _
    $region7: #{tpu_custom_call.1} parent=1 // pred_check_branch
      %12 = sbr.rel (0) target = $region9
    $region8: #{tpu_custom_call.1} parent=1 // pred_region
      _
    $region9: #{tpu_custom_call.1} parent=1 // pred_fallthru
      _
    // Predicated region
    $region10: #{tpu_custom_call.1} parent=1 // pred_check
      _
    $region11: #{tpu_custom_call.1} parent=1 // pred_check_branch
      %14 = sbr.rel (0) target = $region13
    $region12: #{tpu_custom_call.1} parent=1 // pred_region
      _
    $region13: #{tpu_custom_call.1} parent=1 // pred_fallthru
      _
    %v15 = vld [vmem:[%s0] sm:$0x3]
    %v16 = vld [vmem:[%s1] sm:$0xff]
    %v17 = vld [vmem:[%s1 + $0x8] sm:$0xff]
    %v18 = vld [vmem:[%s1 + $0x10] sm:$0xff]
    %v19 = vld [vmem:[%s1 + $0x18] sm:$0xff]
    %v20 = vld [vmem:[%s2] sm:$0x1]
    %v22 = vlaneseq
    %v23 = vshrl.u32 %v22, 7
    %v24 = vsub.s32 0, %v23
    %v25 = vrot.slane %v20, %v24
    %vm27 = vcmask 261120
    %v29 = vsel %vm27, %v15, 0
    %31 = vmatprep.subr.mxu0 0.0
    %32 = vmatpush1.msra.mxu0 %v16
    %33 = vmatprep.subr.mxu0 0.0
    %34 = vmatpush1.msra.mxu0 %v17
    %35 = vmatprep.subr.mxu0 0.0
    %36 = vmatpush1.msra.mxu0 %v18
    %37 = vmatprep.subr.mxu0 0.0
    %38 = vmatpush1.msra.mxu0 %v19
    %39 = vmatprep.subr.mxu0 0.0
    %40 = vmatpush1.msra.mxu0 0.0
    %41 = vmatprep.subr.mxu0 0.0
    %42 = vmatpush1.msra.mxu0 0.0
    %43 = vmatprep.subr.mxu0 0.0
    %44 = vmatpush1.msra.mxu0 0.0
    %45 = vmatprep.subr.mxu0 0.0
    %46 = vmatpush1.msra.mxu0 0.0
    %47 = vmatprep.subr.mxu0 0.0
    %48 = vmatpush1.msra.mxu0 0.0
    %49 = vmatprep.subr.mxu0 0.0
    %50 = vmatpush1.msra.mxu0 0.0
    %51 = vmatprep.subr.mxu0 0.0
    %52 = vmatpush1.msra.mxu0 0.0
    %53 = vmatprep.subr.mxu0 0.0
    %54 = vmatpush1.msra.mxu0 0.0
    %55 = vmatprep.subr.mxu0 0.0
    %56 = vmatpush1.msra.mxu0 0.0
    %57 = vmatprep.subr.mxu0 0.0
    %58 = vmatpush1.msra.mxu0 0.0
    %59 = vmatprep.subr.mxu0 0.0
    %60 = vmatpush1.msra.mxu0 0.0
    %61 = vmatprep.subr.mxu0 0.0
    %62 = vmatpush1.msra.mxu0 0.0
    %63 = vmatprep.subr.mxu0 0.0
    %64 = vmatpush1.msra.mxu0 0.0
    %65 = vmatprep.subr.mxu0 0.0
    %66 = vmatpush1.msra.mxu0 0.0
    %67 = vmatprep.subr.mxu0 0.0
    %68 = vmatpush1.msra.mxu0 0.0
    %69 = vmatprep.subr.mxu0 0.0
    %70 = vmatpush1.msra.mxu0 0.0
    %71 = vmatprep.subr.mxu0 0.0
    %72 = vmatpush1.msra.mxu0 0.0
    %73 = vmatprep.subr.mxu0 0.0
    %74 = vmatpush1.msra.mxu0 0.0
    %75 = vmatprep.subr.mxu0 0.0
    %76 = vmatpush1.msra.mxu0 0.0
    %77 = vmatprep.subr.mxu0 0.0
    %78 = vmatpush1.msra.mxu0 0.0
    %79 = vmatprep.subr.mxu0 0.0
    %80 = vmatpush1.msra.mxu0 0.0
    %81 = vmatprep.subr.mxu0 0.0
    %82 = vmatpush1.msra.mxu0 0.0
    %83 = vmatprep.subr.mxu0 0.0
    %84 = vmatpush1.msra.mxu0 0.0
    %85 = vmatprep.subr.mxu0 0.0
    %86 = vmatpush1.msra.mxu0 0.0
    %87 = vmatprep.subr.mxu0 0.0
    %88 = vmatpush1.msra.mxu0 0.0
    %89 = vmatprep.subr.mxu0 0.0
    %90 = vmatpush1.msra.mxu0 0.0
    %91 = vmatprep.subr.mxu0 0.0
    %92 = vmatpush1.msra.mxu0 0.0
    %93 = vmatprep.subr.mxu0 0.0
    %94 = vmatpush1.msra.mxu0 0.0
    %95 = vmatprep.mubr.f32.mxu0 0.0
    %96 = vmatmul.mubr.f32.gmra.mrb[0].mxu0 %v29
    %v97 = vpop.f32.mrb[0].mxu0
    %v98 = vadd.f32 %v25, %v97
    %v99 = vpop.f32.mrb[0].mxu0
    %100 = vdwg.mxu0
    %vm101 = vcmask 123904
    %102 = vst.msk [vmem:[#allocation2] sm:$0x3] %vm101, %v98
    // Predicated region
    $region14: #{tpu_custom_call.1} parent=1 // pred_check
      _
    $region15: #{tpu_custom_call.1} parent=1 // pred_check_branch
      %104 = sbr.rel (0) target = $region17
    $region16: #{tpu_custom_call.1} parent=1 // pred_region
      %s106 = ssub.s32 32, 32
      %107 = vsyncadd [#allocation3], %s106
      %s109 = sshll.u32 [#allocation2], 4
      %s110 = int_to_ptr.vmem [resolvable:$true] %s109
      %112 = dma.vmem_to_hbm [thread:$0]  %s110, 32, %s3, [#allocation3]
    $region17: #{tpu_custom_call.1} parent=1 // pred_fallthru
      _
    // Predicated region
    $region18: #{tpu_custom_call.1} parent=1 // pred_check
      _
    $region19: #{tpu_custom_call.1} parent=1 // pred_check_branch
      %114 = sbr.rel (0) target = $region21
    $region20: #{tpu_custom_call.1} parent=1 // pred_region
      %115 = dma.done [#allocation3], 32
    $region21: #{tpu_custom_call.1} parent=1 // pred_fallthru
      _
    %116 = vsyncpa [#allocation3], 1

// kernel: tpu_custom_call.1
$region0: #{tpu_custom_call.1}
  #allocation0 [shape = 'u32[]', space=smem, size = 0x4, offset = 0x4, fixed_abs, tag = 'smem constant byte address 0x4 - core index']
  #allocation1 [shape = 'u32[144,128]{1,0:T(1,128)}', space=vmem, size = 0x12000, scoped, tag = 'internal scratch']
  %s0 = inlined_call_operand.vmem [shape: f32[2,32], index: 0, kind: input, shape index: {}]
  %s1 = inlined_call_operand.vmem [shape: f32[32,16], index: 1, kind: input, shape index: {}]
  %s2 = inlined_call_operand.vmem [shape: f32[1,16], index: 2, kind: input, shape index: {}]
  %s3 = inlined_call_operand.hbm [shape: f32[2,16], index: 3, kind: output, shape index: {}]
  %s4 = sld [smem:[#allocation0]]
  $region22: #{tpu_custom_call.1} parent=0
    _
  %s6 = ssub.s32 1, %s4
  %s7 = scalar_select 0, %s6, %s4
  $region1: #{tpu_custom_call.1} parent=0
    #allocation2 [shape = 'u8[1024]{0}', space=vmem, size = 0x400, scoped, tag = 'output window, operand 0, single buffered']
    #allocation3 [shape = 's32[1]{0}', space=sflag, size = 0x4, scoped, tag = 'scoped memory for tpu_custom_call.1']
    %8 = vsyncpa [#allocation3], 0
    // Predicated region
    $region2: #{tpu_custom_call.1} parent=1 // pred_check
      _
    $region3: #{tpu_custom_call.1} parent=1 // pred_check_branch
      %10 = sbr.rel (0) target = $region5
    $region4: #{tpu_custom_call.1} parent=1 // pred_region
      _
    $region5: #{tpu_custom_call.1} parent=1 // pred_fallthru
      _
    // Predicated region
    $region6: #{tpu_custom_call.1} parent=1 // pred_check
      _
    $region7: #{tpu_custom_call.1} parent=1 // pred_check_branch
      %12 = sbr.rel (0) target = $region9
    $region8: #{tpu_custom_call.1} parent=1 // pred_region
      _
    $region9: #{tpu_custom_call.1} parent=1 // pred_fallthru
      _
    // Predicated region
    $region10: #{tpu_custom_call.1} parent=1 // pred_check
      _
    $region11: #{tpu_custom_call.1} parent=1 // pred_check_branch
      %14 = sbr.rel (0) target = $region13
    $region12: #{tpu_custom_call.1} parent=1 // pred_region
      _
    $region13: #{tpu_custom_call.1} parent=1 // pred_fallthru
      _
    %v15 = vld [vmem:[%s0] sm:$0x3]
    %v16 = vld [vmem:[%s1] sm:$0xff]
    %v17 = vld [vmem:[%s1 + $0x8] sm:$0xff]
    %v18 = vld [vmem:[%s1 + $0x10] sm:$0xff]
    %v19 = vld [vmem:[%s1 + $0x18] sm:$0xff]
    %v20 = vld [vmem:[%s2] sm:$0x1]
    %v22 = vlaneseq
    %v23 = vshrl.u32 %v22, 7
    %v24 = vsub.s32 0, %v23
    %v25 = vrot.slane %v20, %v24
    %vm27 = vcmask 261120
    %v29 = vsel %vm27, %v15, 0
    %31 = vmatprep.subr.mxu0 0.0
    %32 = vmatpush1.msra.mxu0 %v16
    %33 = vmatprep.subr.mxu0 0.0
    %34 = vmatpush1.msra.mxu0 %v17
    %35 = vmatprep.subr.mxu0 0.0
    %36 = vmatpush1.msra.mxu0 %v18
    %37 = vmatprep.subr.mxu0 0.0
    %38 = vmatpush1.msra.mxu0 %v19
    %39 = vmatprep.subr.mxu0 0.0
    %40 = vmatpush1.msra.mxu0 0.0
    %41 = vmatprep.subr.mxu0 0.0
    %42 = vmatpush1.msra.mxu0 0.0
    %43 = vmatprep.subr.mxu0 0.0
    %44 = vmatpush1.msra.mxu0 0.0
    %45 = vmatprep.subr.mxu0 0.0
    %46 = vmatpush1.msra.mxu0 0.0
    %47 = vmatprep.subr.mxu0 0.0
    %48 = vmatpush1.msra.mxu0 0.0
    %49 = vmatprep.subr.mxu0 0.0
    %50 = vmatpush1.msra.mxu0 0.0
    %51 = vmatprep.subr.mxu0 0.0
    %52 = vmatpush1.msra.mxu0 0.0
    %53 = vmatprep.subr.mxu0 0.0
    %54 = vmatpush1.msra.mxu0 0.0
    %55 = vmatprep.subr.mxu0 0.0
    %56 = vmatpush1.msra.mxu0 0.0
    %57 = vmatprep.subr.mxu0 0.0
    %58 = vmatpush1.msra.mxu0 0.0
    %59 = vmatprep.subr.mxu0 0.0
    %60 = vmatpush1.msra.mxu0 0.0
    %61 = vmatprep.subr.mxu0 0.0
    %62 = vmatpush1.msra.mxu0 0.0
    %63 = vmatprep.subr.mxu0 0.0
    %64 = vmatpush1.msra.mxu0 0.0
    %65 = vmatprep.subr.mxu0 0.0
    %66 = vmatpush1.msra.mxu0 0.0
    %67 = vmatprep.subr.mxu0 0.0
    %68 = vmatpush1.msra.mxu0 0.0
    %69 = vmatprep.subr.mxu0 0.0
    %70 = vmatpush1.msra.mxu0 0.0
    %71 = vmatprep.subr.mxu0 0.0
    %72 = vmatpush1.msra.mxu0 0.0
    %73 = vmatprep.subr.mxu0 0.0
    %74 = vmatpush1.msra.mxu0 0.0
    %75 = vmatprep.subr.mxu0 0.0
    %76 = vmatpush1.msra.mxu0 0.0
    %77 = vmatprep.subr.mxu0 0.0
    %78 = vmatpush1.msra.mxu0 0.0
    %79 = vmatprep.subr.mxu0 0.0
    %80 = vmatpush1.msra.mxu0 0.0
    %81 = vmatprep.subr.mxu0 0.0
    %82 = vmatpush1.msra.mxu0 0.0
    %83 = vmatprep.subr.mxu0 0.0
    %84 = vmatpush1.msra.mxu0 0.0
    %85 = vmatprep.subr.mxu0 0.0
    %86 = vmatpush1.msra.mxu0 0.0
    %87 = vmatprep.subr.mxu0 0.0
    %88 = vmatpush1.msra.mxu0 0.0
    %89 = vmatprep.subr.mxu0 0.0
    %90 = vmatpush1.msra.mxu0 0.0
    %91 = vmatprep.subr.mxu0 0.0
    %92 = vmatpush1.msra.mxu0 0.0
    %93 = vmatprep.subr.mxu0 0.0
    %94 = vmatpush1.msra.mxu0 0.0
    %95 = vmatprep.mubr.f32.mxu0 0.0
    %96 = vmatmul.mubr.f32.gmra.mrb[0].mxu0 %v29
    %v97 = vpop.f32.mrb[0].mxu0
    %v98 = vadd.f32 %v25, %v97
    %v99 = vpop.f32.mrb[0].mxu0
    %100 = vdwg.mxu0
    %vm101 = vcmask 123904
    %102 = vst.msk [vmem:[#allocation2] sm:$0x3] %vm101, %v98
    // Predicated region
    $region14: #{tpu_custom_call.1} parent=1 // pred_check
      _
    $region15: #{tpu_custom_call.1} parent=1 // pred_check_branch
      %104 = sbr.rel (0) target = $region17
    $region16: #{tpu_custom_call.1} parent=1 // pred_region
      %s106 = ssub.s32 32, 32
      %107 = vsyncadd [#allocation3], %s106
      %s109 = sshll.u32 [#allocation2], 4
      %s110 = int_to_ptr.vmem [resolvable:$true] %s109
      %112 = dma.vmem_to_hbm [thread:$0]  %s110, 32, %s3, [#allocation3]
    $region17: #{tpu_custom_call.1} parent=1 // pred_fallthru
      _
    // Predicated region
    $region18: #{tpu_custom_call.1} parent=1 // pred_check
      _
    $region19: #{tpu_custom_call.1} parent=1 // pred_check_branch
      %114 = sbr.rel (0) target = $region21
    $region20: #{tpu_custom_call.1} parent=1 // pred_region
      %115 = dma.done [#allocation3], 32
    $region21: #{tpu_custom_call.1} parent=1 // pred_fallthru
      _
    %116 = vsyncpa [#allocation3], 1

</llo_original>
